<compile_context>
chip_gen: v6e
topology: v6e:2x2x1
jax: 0.10.0
libtpu: 0.0.40
codegen_flags: <defaults>
</compile_context>

<pallas_src>
import numpy as np
import jax
import jax.numpy as jnp
from jax.experimental import pallas as pl
from jax.experimental.pallas import tpu as pltpu


# --------------------------------------------------------------------------- #
# Parameter setup (plain JAX, done once at module init)
# --------------------------------------------------------------------------- #
def _build_pe_table(d_model: int, max_len: int, dtype=jnp.float32) -> jnp.ndarray:
    """Sinusoidal positional-encoding table, shape (max_len, d_model).

    Same math as the PyTorch module (which also requires even d_model).
    Built once in the activation dtype so the forward pass never casts.
    """
    assert d_model % 2 == 0, "PositionalEncoding requires an even d_model"
    position = jnp.arange(max_len, dtype=jnp.float32)[:, None]                      # (max_len, 1)
    div_term = jnp.exp(
        jnp.arange(0, d_model, 2, dtype=jnp.float32) * (-np.log(10000.0) / d_model)
    )                                                                                # (d_model/2,)
    pe = jnp.zeros((max_len, d_model), dtype=jnp.float32)
    pe = pe.at[:, 0::2].set(jnp.sin(position * div_term))
    pe = pe.at[:, 1::2].set(jnp.cos(position * div_term))
    return pe.astype(dtype)


# --------------------------------------------------------------------------- #
# Kernel
# --------------------------------------------------------------------------- #
def _pe_add_kernel(x_ref, pe_ref, o_ref):
    # x_ref / o_ref: (tS, B, D) block; pe_ref: dense (tS, D) block.
    # Broadcast over the batch (sublane) axis in-kernel; the few VPU/XLU ops are
    # completely hidden behind HBM DMA in this memory-bound add.
    o_ref[...] = x_ref[...] + pe_ref[...][:, None, :]


# --------------------------------------------------------------------------- #
# Sizing helpers
# --------------------------------------------------------------------------- #
def _round_up(a: int, b: int) -> int:
    return ((a + b - 1) // b) * b


def _vmem_capacity_bytes() -> int:
    """Per-core VMEM capacity; conservative (v7x) fallback if the query fails."""
    try:
        info = pltpu.get_tpu_info()
        cap = getattr(info, "vmem_capacity_bytes", None)
        if cap:
            return int(cap)
    except Exception:
        pass
    return 64 * 1024 * 1024


def _pick_tile_s(S: int, B: int, D: int, itemsize: int,
                 *, target_block_bytes: int, budget_bytes: int) -> int:
    """Pick the S-tile so the double-buffered, *padding-aware* VMEM footprint
    fits `budget_bytes`, targeting `target_block_bytes` per x block.

    VMEM padding model:
      x / out blocks (tS, B, D): B pads to the sublane multiple, D to 128 lanes.
      pe block (tS, D):          tS is the sublane dim (kept a multiple of 8).
    """
    sublane_mult = max(8, 32 // itemsize)          # 8 (f32), 16 (bf16), 32 (int8)
    lane_d = _round_up(D, 128)
    pad_b = _round_up(B, sublane_mult)

    x_row_bytes = pad_b * lane_d * itemsize        # per S-row, per buffer (x and out)
    pe_row_bytes = lane_d * itemsize
    per_row_vmem = 2 * (2 * x_row_bytes + pe_row_bytes)   # double-buffered x + out + pe

    ts_budget = max(1, budget_bytes // per_row_vmem)
    ts_target = max(1, target_block_bytes // x_row_bytes)
    tS = min(S, ts_budget, ts_target)

    # Keep >= ~4 grid steps for non-trivial tensors (megacore sharding on v7x
    # and real DMA/compute overlap); skip for tiny inputs.
    if S * B * D * itemsize > 4 * 1024 * 1024:
        tS = min(tS, max(1, pl.cdiv(S, 4)))

    # Alignment: the pe block's sublane dim is tS -> make it a multiple of 8,
    # or fall back to the full S (handled by the caller via a pe slice).
    if tS < S:
        tS = max(8, (tS // 8) * 8) if tS >= 8 else min(S, 8)
    return max(1, min(S, tS))


# --------------------------------------------------------------------------- #
# Forward
# --------------------------------------------------------------------------- #
def positional_encoding_forward(x: jnp.ndarray, pe_table: jnp.ndarray) -> jnp.ndarray:
    """out = x + pe_table[:S][:, None, :].

    x:        (S, B, D) activations.
    pe_table: (max_len, D) sinusoidal table, pre-built in x's dtype.

    NOTE: x is aliased to the output (in-place add).  Callers should donate x
    (e.g. jax.jit(positional_encoding_forward, donate_argnums=0)); the donated
    buffer is invalidated after the call.  Without donation XLA inserts a
    defensive copy of x, which erases the benefit of the alias.
    """
    S, B, D = x.shape
    max_len, d_pe = pe_table.shape
    assert d_pe == D, "pe_table feature dim must match x"
    assert max_len >= S, "sequence length exceeds max_len of the PE table"
    if pe_table.dtype != x.dtype:
        # Prefer building the table in x's dtype at init; this cast is a per-call
        # (max_len, D) materialization fallback only.
        pe_table = pe_table.astype(x.dtype)

    itemsize = jnp.dtype(x.dtype).itemsize
    vmem_cap = _vmem_capacity_bytes()
    # v7x (64 MiB VMEM): ~8 MiB blocks / 48 MiB limit; v5e/v6e (128 MiB): ~4 MiB / 64 MiB.
    vmem_limit = min((vmem_cap * 3) // 4, 64 * 1024 * 1024)
    target_block = 8 * 1024 * 1024 if vmem_cap <= 64 * 1024 * 1024 else 4 * 1024 * 1024

    tS = _pick_tile_s(S, B, D, itemsize,
                      target_block_bytes=target_block,
                      budget_bytes=vmem_limit - 4 * 1024 * 1024)

    # If the chosen tile is the full (non-multiple-of-8) sequence, slice pe so the
    # pe block spans its entire first dim (satisfies the block-shape rule cheaply).
    pe_in = pe_table
    if tS % 8 != 0:           # only possible when tS == S
        pe_in = pe_table[:S]

    grid = (pl.cdiv(S, tS),)

    return pl.pallas_call(
        _pe_add_kernel,
        out_shape=jax.ShapeDtypeStruct((S, B, D), x.dtype),
        grid=grid,
        in_specs=[
            pl.BlockSpec((tS, B, D), lambda i: (i, 0, 0)),   # x
            pl.BlockSpec((tS, D), lambda i: (i, 0)),         # pe (dense 2-D block)
        ],
        out_specs=pl.BlockSpec((tS, B, D), lambda i: (i, 0, 0)),
        input_output_aliases={0: 0},                         # x -> out (requires donation)
        compiler_params=pltpu.CompilerParams(
            dimension_semantics=("parallel",),               # v7x: shard S-tiles across TCs
            vmem_limit_bytes=vmem_limit,
        ),
    )(x, pe_in)


# --------------------------------------------------------------------------- #
# Demo / self-test
# --------------------------------------------------------------------------- #
if __name__ == "__main__":
    # Small shapes implied by the forward: x is (seq_len, batch, d_model).
    seq_len, batch, d_model = 8, 2, 32
    max_len = 64

    key = jax.random.PRNGKey(0)
    x = jax.random.normal(key, (seq_len, batch, d_model), dtype=jnp.float32)

    pe_table = _build_pe_table(d_model, max_len, dtype=x.dtype)

    # Reference (pure JAX) BEFORE the kernel call — x is donated/aliased below.
    ref = jax.block_until_ready(x + pe_table[:seq_len, :][:, None, :])

    fwd = jax.jit(positional_encoding_forward, donate_argnums=0)
    out = jax.block_until_ready(fwd(x, pe_table))
    del x  # donated; buffer is no longer valid

    np.testing.assert_allclose(np.asarray(out), np.asarray(ref), rtol=1e-6, atol=1e-6)

    print("KERNEL_OK")
</pallas_src>

<mosaic_0001>
module attributes {stable_mosaic.version = 11 : i64} {
  func.func @_pe_add_kernel(%arg0: i32, %arg1: memref<8x2x32xf32, #tpu.memory_space<vmem>>, %arg2: memref<8x32xf32, #tpu.memory_space<vmem>>, %arg3: memref<8x2x32xf32, #tpu.memory_space<vmem>>) attributes {dimension_semantics = [#tpu.dimension_semantics<parallel>], iteration_bounds = array<i64: 1>, scalar_prefetch = 0 : i64, scratch_operands = 0 : i64, tpu.core_type = #tpu.core_type<tc>, window_params = [{transform_indices = @transform_0, window_bounds = array<i64: 8, 2, 32>}, {transform_indices = @transform_1, window_bounds = array<i64: 8, 32>}, {transform_indices = @transform_2, window_bounds = array<i64: 8, 2, 32>}]} {
    %c0 = arith.constant 0 : index
    %c0_0 = arith.constant 0 : index
    %c0_1 = arith.constant 0 : index
    %0 = vector.load %arg1[%c0, %c0_0, %c0_1] : memref<8x2x32xf32, #tpu.memory_space<vmem>>, vector<8x2x32xf32>
    %c0_2 = arith.constant 0 : index
    %c0_3 = arith.constant 0 : index
    %1 = vector.load %arg2[%c0_2, %c0_3] : memref<8x32xf32, #tpu.memory_space<vmem>>, vector<8x32xf32>
    %2 = vector.shape_cast %1 : vector<8x32xf32> to vector<8x1x32xf32>
    %3 = vector.broadcast %2 : vector<8x1x32xf32> to vector<8x2x32xf32>
    %4 = arith.addf %0, %3 : vector<8x2x32xf32>
    %c0_4 = arith.constant 0 : index
    %c0_5 = arith.constant 0 : index
    %c0_6 = arith.constant 0 : index
    %5 = vector.load %arg3[%c0_4, %c0_5, %c0_6] : memref<8x2x32xf32, #tpu.memory_space<vmem>>, vector<8x2x32xf32>
    tpu.vector_store %arg3[%c0_4, %c0_5, %c0_6], %4 {strides = array<i32>} : memref<8x2x32xf32, #tpu.memory_space<vmem>>, vector<8x2x32xf32>,
    return
  }
  func.func @transform_0(%arg0: i32) -> (i32, i32, i32) {
    %c0_i32 = arith.constant 0 : i32
    %c0_i32_0 = arith.constant 0 : i32
    %c0_i32_1 = arith.constant 0 : i32
    return %arg0, %c0_i32, %c0_i32_0 : i32, i32, i32
  }
  func.func @transform_1(%arg0: i32) -> (i32, i32) {
    %c0_i32 = arith.constant 0 : i32
    %c0_i32_0 = arith.constant 0 : i32
    return %arg0, %c0_i32 : i32, i32
  }
  func.func @transform_2(%arg0: i32) -> (i32, i32, i32) {
    %c0_i32 = arith.constant 0 : i32
    %c0_i32_0 = arith.constant 0 : i32
    %c0_i32_1 = arith.constant 0 : i32
    return %arg0, %c0_i32, %c0_i32_0 : i32, i32, i32
  }
}

</mosaic_0001>

<llo_original>
// kernel: positional_encoding_forward.1
$region0: #{positional_encoding_forward.1}
  #allocation0 [shape = 'u32[]', space=smem, size = 0x4, offset = 0x4, fixed_abs, tag = 'smem constant byte address 0x4 - core index']
  #allocation1 [shape = 'u32[144,128]{1,0:T(1,128)}', space=vmem, size = 0x12000, scoped, tag = 'internal scratch']
  %s0 = inlined_call_operand.hbm [shape: f32[8,2,32], index: 0, kind: input, shape index: {}, may-alias: {0,2}]
  %s1 = inlined_call_operand.vmem [shape: f32[64,32], index: 1, kind: input, shape index: {}]
  %s2 = inlined_call_operand.hbm [shape: f32[8,2,32], index: 2, kind: output, shape index: {}, may-alias: {0,2}]
  %s3 = sld [smem:[#allocation0]]
  $region22: #{positional_encoding_forward.1} parent=0
    _
  %s5 = ssub.s32 1, %s3
  %s6 = scalar_select 0, %s5, %s3
  $region1: #{positional_encoding_forward.1} parent=0
    #allocation2 [shape = 'u8[8192]{0}', space=vmem, size = 0x2000, scoped, tag = 'input window, operand 0, single buffered']
    #allocation3 [shape = 's32[1]{0}', space=sflag, size = 0x4, scoped, tag = 'scoped memory for positional_encoding_forward.1']
    #allocation4 [shape = 's32[1]{0}', space=sflag, size = 0x4, scoped, tag = 'scoped memory for positional_encoding_forward.1']
    #allocation5 [shape = 'u8[8192]{0}', space=vmem, size = 0x2000, scoped, tag = 'output window, operand 0, single buffered']
    %7 = vsyncpa [#allocation3], 0
    %8 = vsyncpa [#allocation4], 0
    // Predicated region
    $region2: #{positional_encoding_forward.1} parent=1 // pred_check
      _
    $region3: #{positional_encoding_forward.1} parent=1 // pred_check_branch
      %10 = sbr.rel (0) target = $region5
    $region4: #{positional_encoding_forward.1} parent=1 // pred_region
      %s12 = ssub.s32 256, 256
      %13 = vsyncadd [#allocation3], %s12
      %s14 = sshll.u32 [#allocation2], 4
      %s15 = int_to_ptr.vmem [resolvable:$true] %s14
      %20 = dma.hbm_to_vmem [thread:$0]  %s0, 256, %s15, [#allocation3], 32, 32, 2
    $region5: #{positional_encoding_forward.1} parent=1 // pred_fallthru
      _
    // Predicated region
    $region6: #{positional_encoding_forward.1} parent=1 // pred_check
      _
    $region7: #{positional_encoding_forward.1} parent=1 // pred_check_branch
      %22 = sbr.rel (0) target = $region9
    $region8: #{positional_encoding_forward.1} parent=1 // pred_region
      _
    $region9: #{positional_encoding_forward.1} parent=1 // pred_fallthru
      _
    // Predicated region
    $region10: #{positional_encoding_forward.1} parent=1 // pred_check
      _
    $region11: #{positional_encoding_forward.1} parent=1 // pred_check_branch
      %24 = sbr.rel (0) target = $region13
    $region12: #{positional_encoding_forward.1} parent=1 // pred_region
      %25 = dma.done [#allocation3], 256
    $region13: #{positional_encoding_forward.1} parent=1 // pred_fallthru
      _
    %v26 = vld [vmem:[#allocation2] sm:$0x3]
    %v27 = vld [vmem:[#allocation2 + $0x2] sm:$0x3]
    %v28 = vld [vmem:[#allocation2 + $0x4] sm:$0x3]
    %v29 = vld [vmem:[#allocation2 + $0x6] sm:$0x3]
    %v30 = vld [vmem:[#allocation2 + $0x8] sm:$0x3]
    %v31 = vld [vmem:[#allocation2 + $0xa] sm:$0x3]
    %v32 = vld [vmem:[#allocation2 + $0xc] sm:$0x3]
    %v33 = vld [vmem:[#allocation2 + $0xe] sm:$0x3]
    %v34 = vld [vmem:[%s1] sm:$0xff]
    %v36 = vcombine.high %v34, %v34
    %v38 = vunpack.c.l.s4 1966171168
    %v39 = vunpack.c.0.s8 %v38
    %v40 = vlaneseq
    %v41 = vshrl.u32 %v40, 7
    %v42 = vsub.s32 %v39, %v41
    %v43 = vrot.slane %v34, %v42
    %v45 = vunpack.c.l.s4 1966171168
    %v46 = vunpack.c.0.s8 %v45
    %v47 = vlaneseq
    %v48 = vshrl.u32 %v47, 7
    %v49 = vsub.s32 %v46, %v48
    %v50 = vrot.slane %v36, %v49
    %v51 = vcombine.high %v43, %v43
    %v52 = vcombine.high %v50, %v50
    %v54 = vunpack.c.l.s4 1966171168
    %v55 = vunpack.c.0.s8 %v54
    %v56 = vlaneseq
    %v57 = vshrl.u32 %v56, 7
    %v58 = vsub.s32 %v55, %v57
    %v59 = vrot.slane %v43, %v58
    %v61 = vunpack.c.l.s4 1966171168
    %v62 = vunpack.c.0.s8 %v61
    %v63 = vlaneseq
    %v64 = vshrl.u32 %v63, 7
    %v65 = vsub.s32 %v62, %v64
    %v66 = vrot.slane %v50, %v65
    %v68 = vunpack.c.l.s4 1966171168
    %v69 = vunpack.c.0.s8 %v68
    %v70 = vlaneseq
    %v71 = vshrl.u32 %v70, 7
    %v72 = vsub.s32 %v69, %v71
    %v73 = vrot.slane %v51, %v72
    %v75 = vunpack.c.l.s4 1966171168
    %v76 = vunpack.c.0.s8 %v75
    %v77 = vlaneseq
    %v78 = vshrl.u32 %v77, 7
    %v79 = vsub.s32 %v76, %v78
    %v80 = vrot.slane %v52, %v79
    %v81 = vcombine.high %v59, %v59
    %v82 = vcombine.high %v66, %v66
    %v83 = vcombine.high %v73, %v73
    %v84 = vcombine.high %v80, %v80
    %v85 = vlaneseq
    %v86 = vshrl.u32 %v85, 7
    %v87 = vsub.s32 0, %v86
    %v88 = vrot.slane %v59, %v87
    %v89 = vlaneseq
    %v90 = vshrl.u32 %v89, 7
    %v91 = vsub.s32 0, %v90
    %v92 = vrot.slane %v73, %v91
    %v93 = vlaneseq
    %v94 = vshrl.u32 %v93, 7
    %v95 = vsub.s32 0, %v94
    %v96 = vrot.slane %v81, %v95
    %v97 = vlaneseq
    %v98 = vshrl.u32 %v97, 7
    %v99 = vsub.s32 0, %v98
    %v100 = vrot.slane %v83, %v99
    %v101 = vlaneseq
    %v102 = vshrl.u32 %v101, 7
    %v103 = vsub.s32 0, %v102
    %v104 = vrot.slane %v66, %v103
    %v105 = vlaneseq
    %v106 = vshrl.u32 %v105, 7
    %v107 = vsub.s32 0, %v106
    %v108 = vrot.slane %v80, %v107
    %v109 = vlaneseq
    %v110 = vshrl.u32 %v109, 7
    %v111 = vsub.s32 0, %v110
    %v112 = vrot.slane %v82, %v111
    %v113 = vlaneseq
    %v114 = vshrl.u32 %v113, 7
    %v115 = vsub.s32 0, %v114
    %v116 = vrot.slane %v84, %v115
    %v125 = vadd.f32 %v26, %v88
    %v126 = vadd.f32 %v27, %v92
    %v127 = vadd.f32 %v28, %v96
    %v128 = vadd.f32 %v29, %v100
    %v129 = vadd.f32 %v30, %v104
    %v130 = vadd.f32 %v31, %v108
    %v131 = vadd.f32 %v32, %v112
    %v132 = vadd.f32 %v33, %v116
    %vm133 = vcmask 254976
    %134 = vst.msk [vmem:[#allocation5] sm:$0x3] %vm133, %v125
    %135 = vst.msk [vmem:[#allocation5 + $0x2] sm:$0x3] %vm133, %v126
    %136 = vst.msk [vmem:[#allocation5 + $0x4] sm:$0x3] %vm133, %v127
    %137 = vst.msk [vmem:[#allocation5 + $0x6] sm:$0x3] %vm133, %v128
    %138 = vst.msk [vmem:[#allocation5 + $0x8] sm:$0x3] %vm133, %v129
    %139 = vst.msk [vmem:[#allocation5 + $0xa] sm:$0x3] %vm133, %v130
    %140 = vst.msk [vmem:[#allocation5 + $0xc] sm:$0x3] %vm133, %v131
    %141 = vst.msk [vmem:[#allocation5 + $0xe] sm:$0x3] %vm133, %v132
    // Predicated region
    $region14: #{positional_encoding_forward.1} parent=1 // pred_check
      _
    $region15: #{positional_encoding_forward.1} parent=1 // pred_check_branch
      %143 = sbr.rel (0) target = $region17
    $region16: #{positional_encoding_forward.1} parent=1 // pred_region
      %s145 = ssub.s32 256, 256
      %146 = vsyncadd [#allocation4], %s145
      %s147 = sshll.u32 [#allocation5], 4
      %s148 = int_to_ptr.vmem [resolvable:$true] %s147
      %153 = dma.vmem_to_hbm [thread:$0]  %s148, 256, %s2, [#allocation4], 32, 32, 2
    $region17: #{positional_encoding_forward.1} parent=1 // pred_fallthru
      _
    // Predicated region
    $region18: #{positional_encoding_forward.1} parent=1 // pred_check
      _
    $region19: #{positional_encoding_forward.1} parent=1 // pred_check_branch
      %155 = sbr.rel (0) target = $region21
    $region20: #{positional_encoding_forward.1} parent=1 // pred_region
      %156 = dma.done [#allocation4], 256
    $region21: #{positional_encoding_forward.1} parent=1 // pred_fallthru
      _
    %157 = vsyncpa [#allocation3], 1
    %158 = vsyncpa [#allocation4], 1

</llo_original>
